<compile_context>
chip_gen: v5e
topology: v5e:2x2
jax: 0.10.0
libtpu: 0.0.40
codegen_flags: <defaults>
</compile_context>

<pallas_src>
import jax
import jax.numpy as jnp
from jax.experimental import pallas as pl
from jax.experimental.pallas import tpu as pltpu

HIDDEN = 128


def _round_up(x, m):
    return ((x + m - 1) // m) * m


def _vmem_capacity_bytes():
    try:
        info = pltpu.get_tpu_info()
        cap = getattr(info, "vmem_capacity_bytes", None)
        if cap:
            return int(cap)
    except Exception:
        pass
    return 64 << 20  # conservative floor: v7x per-TensorCore VMEM


def _make_kernel(n_x, teacher_num, *, approx_recip=True):
    T = teacher_num
    # Matches the torch module: assumes teacher_num > 1 (else div-by-zero).
    inv_tm1 = 1.0 / (T - 1) if T > 1 else 1.0
    third = 1.0 / 3.0

    def _softmax(x):
        m = jnp.max(x, axis=-1, keepdims=True)
        e = jnp.exp(x - m)
        s = jnp.sum(e, axis=-1, keepdims=True)
        return e * pl.reciprocal(s, approx=approx_recip)

    def kernel(*refs):
        x_refs = refs[:n_x]
        w_refs = refs[n_x:2 * n_x]
        (ces_ref, ldiv_ref, fdiv_ref,
         wl_ref, bl_ref, wf_ref, bf_ref,
         out_l_ref, out_f_ref) = refs[2 * n_x:]

        # ---- steam: Linear(bias=False) + ReLU.
        # Fused path: n_x == 1 -> single K-accumulated (tb, A) x (A, 128) dot.
        # Split path (all widths 128-aligned): per-teacher matmul sum.
        acc = jnp.dot(x_refs[0][...], w_refs[0][...],
                      preferred_element_type=jnp.float32)
        for i in range(1, n_x):
            acc = acc + jnp.dot(x_refs[i][...], w_refs[i][...],
                                preferred_element_type=jnp.float32)
        out1 = jnp.maximum(acc, 0.0)                          # (tb, 128) f32

        # ---- heads: two tiny (128, T) matmuls + plain row softmax.
        zl = jnp.dot(out1, wl_ref[...],
                     preferred_element_type=jnp.float32) + bl_ref[...]
        zf = jnp.dot(out1, wf_ref[...],
                     preferred_element_type=jnp.float32) + bf_ref[...]
        logit_w = _softmax(zl)
        feat_w = _softmax(zf)

        # ---- aux terms: softmax(t_ces) computed once, reused by both heads.
        # Note: on a partial trailing batch tile the un-DMA'd padding rows may
        # produce NaN/inf here; that is benign because per-row softmax keeps
        # them in those rows and the masked output writeback discards them.
        w_t = (1.0 - _softmax(ces_ref[...])) * inv_tm1
        d_l = _softmax(ldiv_ref[...])
        d_f = _softmax(fdiv_ref[...])

        out_l_ref[...] = (logit_w + w_t + d_l) * third
        out_f_ref[...] = (feat_w + w_t + d_f) * third

    return kernel


def init_params(key, input_sizes, teacher_num):
    all_in = int(sum(input_sizes))
    k1, k2, k3, k4, k5 = jax.random.split(key, 5)
    # torch nn.Linear stores W as (out, in); we keep (in, out) for the kernel.
    w_steam = jax.random.normal(k1, (all_in, HIDDEN), jnp.float32) * 0.05
    w_logit = jax.random.normal(k2, (HIDDEN, teacher_num), jnp.float32) * 0.05
    b_logit = jax.random.normal(k3, (1, teacher_num), jnp.float32) * 0.05
    w_feat = jax.random.normal(k4, (HIDDEN, teacher_num), jnp.float32) * 0.05
    b_feat = jax.random.normal(k5, (1, teacher_num), jnp.float32) * 0.05
    return dict(w_steam=w_steam, w_logit=w_logit, b_logit=b_logit,
                w_feat=w_feat, b_feat=b_feat)


def policy_trans_forward(params, teacher_infos, t_ces, t_s_logit_div,
                         t_s_feat_div, *, block_rows=2048,
                         compute_dtype=jnp.bfloat16, approx_recip=True):
    """Returns (all_logit_weights, all_feature_weights), each (B, teacher_num).

    compute_dtype controls the steam-matmul input/weight dtype only
    (accumulation and all softmax math stay f32).  bf16 is the default on all
    TPU generations (halves the dominant HBM stream); f32 gives a bit-accurate
    path; fp8 (e.g. jnp.float8_e4m3fn) is usable on v7x.
    """
    # TODO(synk): dynamic=True branch (learned convex-combination factors) not
    # implemented; module default dynamic=False is what the kernel reproduces.
    input_sizes = tuple(int(t.shape[1]) for t in teacher_infos)
    A = int(sum(input_sizes))
    B = int(teacher_infos[0].shape[0])
    T = int(t_ces.shape[1])
    H = HIDDEN
    itemsize = jnp.dtype(compute_dtype).itemsize

    # --- steam inputs / weights: fuse into a single lane-dense K unless every
    # teacher width is a (>=128) multiple of 128.
    split_ok = (len(input_sizes) > 1
                and all(a % 128 == 0 and a >= 128 for a in input_sizes))
    if split_ok:
        xs = [t.astype(compute_dtype) for t in teacher_infos]
        ws, off = [], 0
        for a in input_sizes:
            ws.append(params["w_steam"][off:off + a, :].astype(compute_dtype))
            off += a
        x_widths = list(input_sizes)
    else:
        if len(teacher_infos) == 1:
            x = teacher_infos[0].astype(compute_dtype)
        else:
            x = jnp.concatenate([t.astype(compute_dtype) for t in teacher_infos],
                                axis=1)
        xs = [x]
        ws = [params["w_steam"].astype(compute_dtype)]
        x_widths = [A]
    n_x = len(xs)

    # Aux / head params stay f32 (softmax precision); aux passed un-duplicated.
    ces = t_ces.astype(jnp.float32)
    ldiv = t_s_logit_div.astype(jnp.float32)
    fdiv = t_s_feat_div.astype(jnp.float32)
    wl = params["w_logit"].astype(jnp.float32)
    bl = params["b_logit"].astype(jnp.float32)
    wf = params["w_feat"].astype(jnp.float32)
    bf = params["b_feat"].astype(jnp.float32)

    # --- batch tile size derived from the real VMEM footprint.
    row_mult = {4: 8, 2: 16, 1: 32}.get(itemsize, 8)   # sublane packing
    lanes = lambda w: _round_up(w, 128)

    pinned = (sum(_round_up(a, row_mult) * H for a in x_widths) * itemsize
              + 2 * H * lanes(T) * 4            # head weights
              + 2 * 8 * lanes(T) * 4)           # head biases (sublane padded)
    per_row = 2 * (sum(lanes(a) for a in x_widths) * itemsize   # x (2-buffered)
                   + 3 * lanes(T) * 4                            # aux
                   + 2 * lanes(T) * 4)                           # outputs

    vmem_cap = _vmem_capacity_bytes()
    budget = int(vmem_cap * 0.75)
    tb_cap = max(row_mult, (budget - 2 * pinned) // per_row)
    tb = min(B, block_rows, tb_cap)
    if B >= 2 * row_mult:
        # Keep >= 2 grid steps so dual-TC chips (v7x megacore) split the
        # "parallel" batch axis; negligible per-step cost on single-TC chips.
        tb = min(tb, _round_up((B + 1) // 2, row_mult))
    if tb < B:
        tb = max(row_mult, (tb // row_mult) * row_mult)
    grid = (pl.cdiv(B, tb),)

    interm = 12 * tb * lanes(H) * 4              # in-kernel temporaries
    vmem_limit = min(int(vmem_cap * 0.9),
                     max(16 << 20, 2 * pinned + per_row * tb + interm + (4 << 20)))

    def row_spec(width):
        return pl.BlockSpec((tb, width), lambda g: (g, 0))

    def pinned_spec(shape, single_buffer):
        if single_buffer:
            return pl.BlockSpec(shape, lambda g: (0,) * len(shape),
                                pipeline_mode=pl.Buffered(buffer_count=1))
        return pl.BlockSpec(shape, lambda g: (0,) * len(shape))

    out_shape = (jax.ShapeDtypeStruct((B, T), jnp.float32),
                 jax.ShapeDtypeStruct((B, T), jnp.float32))
    out_specs = (row_spec(T), row_spec(T))

    cost = pl.CostEstimate(
        flops=2 * B * A * H + 2 * B * H * 2 * T,
        transcendentals=5 * B * T,
        bytes_accessed=(B * A * itemsize + A * H * itemsize     # steam
                        + 3 * B * T * 4                          # aux (f32)
                        + 2 * (H * T + T) * 4                    # head params
                        + 2 * B * T * 4))                        # outputs

    def call(single_buffer):
        in_specs = ([row_spec(a) for a in x_widths]
                    + [pinned_spec((a, H), single_buffer) for a in x_widths]
                    + [row_spec(T), row_spec(T), row_spec(T)]
                    + [pinned_spec((H, T), single_buffer),
                       pinned_spec((1, T), single_buffer),
                       pinned_spec((H, T), single_buffer),
                       pinned_spec((1, T), single_buffer)])
        return pl.pallas_call(
            _make_kernel(n_x, T, approx_recip=approx_recip),
            grid=grid,
            in_specs=in_specs,
            out_specs=out_specs,
            out_shape=out_shape,
            compiler_params=pltpu.CompilerParams(
                dimension_semantics=("parallel",),
                vmem_limit_bytes=int(vmem_limit)),
            cost_estimate=cost,
        )(*xs, *ws, ces, ldiv, fdiv, wl, bl, wf, bf)

    try:
        return call(True)
    except Exception:
        # Fallback for runtimes where pl.Buffered(1) on constant-index blocks
        # is unsupported: accept default double-buffering of pinned weights.
        return call(False)


def policy_trans_reference(params, teacher_infos, t_ces, t_s_logit_div,
                           t_s_feat_div):
    T = t_ces.shape[1]
    x = jnp.concatenate(teacher_infos, axis=1)
    out1 = jax.nn.relu(x @ params["w_steam"])
    lw = jax.nn.softmax(out1 @ params["w_logit"] + params["b_logit"], axis=1)
    fw = jax.nn.softmax(out1 @ params["w_feat"] + params["b_feat"], axis=1)
    wlt = (1.0 - jax.nn.softmax(t_ces, axis=1)) / (T - 1)
    wld = jax.nn.softmax(t_s_logit_div, axis=1)
    wfd = jax.nn.softmax(t_s_feat_div, axis=1)
    return (lw + wlt + wld) / 3.0, (fw + wlt + wfd) / 3.0


if __name__ == "__main__":
    teacher_num = 3
    input_sizes = [16, 16, 16]          # per-teacher feature widths
    batch = 8

    key = jax.random.PRNGKey(0)
    pkey, dkey = jax.random.split(key)
    params = init_params(pkey, input_sizes, teacher_num)

    dks = jax.random.split(dkey, teacher_num + 3)
    teacher_infos = [
        jax.random.normal(dks[i], (batch, input_sizes[i]), jnp.float32)
        for i in range(teacher_num)
    ]
    t_ces = jax.random.normal(dks[teacher_num + 0], (batch, teacher_num),
                              jnp.float32)
    t_s_logit_div = jax.random.normal(dks[teacher_num + 1],
                                      (batch, teacher_num), jnp.float32)
    t_s_feat_div = jax.random.normal(dks[teacher_num + 2],
                                     (batch, teacher_num), jnp.float32)

    ref_logit, ref_feat = policy_trans_reference(
        params, teacher_infos, t_ces, t_s_logit_div, t_s_feat_div)

    # f32 steam path: tight check against the reference.
    out_logit, out_feat = policy_trans_forward(
        params, teacher_infos, t_ces, t_s_logit_div, t_s_feat_div,
        compute_dtype=jnp.float32)
    jax.block_until_ready((out_logit, out_feat))
    assert jnp.allclose(out_logit, ref_logit, atol=2e-3, rtol=2e-3)
    assert jnp.allclose(out_feat, ref_feat, atol=2e-3, rtol=2e-3)

    # Default path (bf16 steam matmul, the mem-bound win on all generations).
    # TODO(synk): fp8 steam path (compute_dtype=jnp.float8_e4m3fn) is v7x-only
    # and not exercised here.
    out_logit_bf, out_feat_bf = policy_trans_forward(
        params, teacher_infos, t_ces, t_s_logit_div, t_s_feat_div)
    jax.block_until_ready((out_logit_bf, out_feat_bf))
    assert jnp.allclose(out_logit_bf, ref_logit, atol=2e-2, rtol=2e-2)
    assert jnp.allclose(out_feat_bf, ref_feat, atol=2e-2, rtol=2e-2)

    print("KERNEL_OK")
</pallas_src>

<mosaic_0001>
module attributes {stable_mosaic.version = 11 : i64} {
  func.func @kernel(%arg0: i32, %arg1: memref<8x48xf32, #tpu.memory_space<vmem>>, %arg2: memref<48x128xf32, #tpu.memory_space<vmem>>, %arg3: memref<8x3xf32, #tpu.memory_space<vmem>>, %arg4: memref<8x3xf32, #tpu.memory_space<vmem>>, %arg5: memref<8x3xf32, #tpu.memory_space<vmem>>, %arg6: memref<128x3xf32, #tpu.memory_space<vmem>>, %arg7: memref<1x3xf32, #tpu.memory_space<vmem>>, %arg8: memref<128x3xf32, #tpu.memory_space<vmem>>, %arg9: memref<1x3xf32, #tpu.memory_space<vmem>>, %arg10: memref<8x3xf32, #tpu.memory_space<vmem>>, %arg11: memref<8x3xf32, #tpu.memory_space<vmem>>) attributes {dimension_semantics = [#tpu.dimension_semantics<parallel>], iteration_bounds = array<i64: 1>, scalar_prefetch = 0 : i64, scratch_operands = 0 : i64, tpu.core_type = #tpu.core_type<tc>, window_params = [{transform_indices = @transform_0, window_bounds = array<i64: 8, 48>}, {pipeline_mode = #tpu.pipeline_mode<synchronous>, transform_indices = @transform_1, window_bounds = array<i64: 48, 128>}, {transform_indices = @transform_2, window_bounds = array<i64: 8, 3>}, {transform_indices = @transform_3, window_bounds = array<i64: 8, 3>}, {transform_indices = @transform_4, window_bounds = array<i64: 8, 3>}, {pipeline_mode = #tpu.pipeline_mode<synchronous>, transform_indices = @transform_5, window_bounds = array<i64: 128, 3>}, {pipeline_mode = #tpu.pipeline_mode<synchronous>, transform_indices = @transform_6, window_bounds = array<i64: 1, 3>}, {pipeline_mode = #tpu.pipeline_mode<synchronous>, transform_indices = @transform_7, window_bounds = array<i64: 128, 3>}, {pipeline_mode = #tpu.pipeline_mode<synchronous>, transform_indices = @transform_8, window_bounds = array<i64: 1, 3>}, {transform_indices = @transform_9, window_bounds = array<i64: 8, 3>}, {transform_indices = @transform_10, window_bounds = array<i64: 8, 3>}]} {
    %c0 = arith.constant 0 : index
    %c0_0 = arith.constant 0 : index
    %0 = vector.load %arg1[%c0, %c0_0] : memref<8x48xf32, #tpu.memory_space<vmem>>, vector<8x48xf32>
    %c0_1 = arith.constant 0 : index
    %c0_2 = arith.constant 0 : index
    %1 = vector.load %arg2[%c0_1, %c0_2] : memref<48x128xf32, #tpu.memory_space<vmem>>, vector<48x128xf32>
    %cst = arith.constant dense<0.000000e+00> : vector<8x128xf32>
    %2 = tpu.matmul %0, %1, %cst {dimension_numbers = #tpu.dot_dimension_numbers<[1], [0], [0], [1], [0, 0, 1, 1], [], []>} : vector<8x48xf32>, vector<48x128xf32>, vector<8x128xf32> -> vector<8x128xf32>
    %cst_3 = arith.constant 0.000000e+00 : f32
    %3 = vector.broadcast %cst_3 : f32 to vector<8x128xf32>
    %4 = arith.maximumf %2, %3 : vector<8x128xf32>
    %c0_4 = arith.constant 0 : index
    %c0_5 = arith.constant 0 : index
    %5 = vector.load %arg6[%c0_4, %c0_5] : memref<128x3xf32, #tpu.memory_space<vmem>>, vector<128x3xf32>
    %cst_6 = arith.constant dense<0.000000e+00> : vector<8x3xf32>
    %6 = tpu.matmul %4, %5, %cst_6 {dimension_numbers = #tpu.dot_dimension_numbers<[1], [0], [0], [1], [0, 0, 1, 1], [], []>} : vector<8x128xf32>, vector<128x3xf32>, vector<8x3xf32> -> vector<8x3xf32>
    %c0_7 = arith.constant 0 : index
    %c0_8 = arith.constant 0 : index
    %7 = vector.load %arg7[%c0_7, %c0_8] : memref<1x3xf32, #tpu.memory_space<vmem>>, vector<1x3xf32>
    %8 = vector.broadcast %7 : vector<1x3xf32> to vector<8x3xf32>
    %9 = arith.addf %6, %8 : vector<8x3xf32>
    %c0_9 = arith.constant 0 : index
    %c0_10 = arith.constant 0 : index
    %10 = vector.load %arg8[%c0_9, %c0_10] : memref<128x3xf32, #tpu.memory_space<vmem>>, vector<128x3xf32>
    %cst_11 = arith.constant dense<0.000000e+00> : vector<8x3xf32>
    %11 = tpu.matmul %4, %10, %cst_11 {dimension_numbers = #tpu.dot_dimension_numbers<[1], [0], [0], [1], [0, 0, 1, 1], [], []>} : vector<8x128xf32>, vector<128x3xf32>, vector<8x3xf32> -> vector<8x3xf32>
    %c0_12 = arith.constant 0 : index
    %c0_13 = arith.constant 0 : index
    %12 = vector.load %arg9[%c0_12, %c0_13] : memref<1x3xf32, #tpu.memory_space<vmem>>, vector<1x3xf32>
    %13 = vector.broadcast %12 : vector<1x3xf32> to vector<8x3xf32>
    %14 = arith.addf %11, %13 : vector<8x3xf32>
    %cst_14 = arith.constant dense<0xFF800000> : vector<8xf32>
    %15 = vector.multi_reduction <maximumf>, %9, %cst_14 [1] : vector<8x3xf32> to vector<8xf32>
    %16 = vector.shape_cast %15 : vector<8xf32> to vector<8x1xf32>
    %17 = vector.broadcast %16 : vector<8x1xf32> to vector<8x3xf32>
    %18 = arith.subf %9, %17 : vector<8x3xf32>
    %19 = math.exp %18 : vector<8x3xf32>
    %cst_15 = arith.constant dense<0.000000e+00> : vector<8xf32>
    %20 = vector.multi_reduction <add>, %19, %cst_15 [1] : vector<8x3xf32> to vector<8xf32>
    %21 = vector.shape_cast %20 : vector<8xf32> to vector<8x1xf32>
    %22 = tpu.reciprocal %21 {approx = true} : vector<8x1xf32> -> vector<8x1xf32>
    %23 = vector.broadcast %22 : vector<8x1xf32> to vector<8x3xf32>
    %24 = arith.mulf %19, %23 : vector<8x3xf32>
    %cst_16 = arith.constant dense<0xFF800000> : vector<8xf32>
    %25 = vector.multi_reduction <maximumf>, %14, %cst_16 [1] : vector<8x3xf32> to vector<8xf32>
    %26 = vector.shape_cast %25 : vector<8xf32> to vector<8x1xf32>
    %27 = vector.broadcast %26 : vector<8x1xf32> to vector<8x3xf32>
    %28 = arith.subf %14, %27 : vector<8x3xf32>
    %29 = math.exp %28 : vector<8x3xf32>
    %cst_17 = arith.constant dense<0.000000e+00> : vector<8xf32>
    %30 = vector.multi_reduction <add>, %29, %cst_17 [1] : vector<8x3xf32> to vector<8xf32>
    %31 = vector.shape_cast %30 : vector<8xf32> to vector<8x1xf32>
    %32 = tpu.reciprocal %31 {approx = true} : vector<8x1xf32> -> vector<8x1xf32>
    %33 = vector.broadcast %32 : vector<8x1xf32> to vector<8x3xf32>
    %34 = arith.mulf %29, %33 : vector<8x3xf32>
    %c0_18 = arith.constant 0 : index
    %c0_19 = arith.constant 0 : index
    %35 = vector.load %arg3[%c0_18, %c0_19] : memref<8x3xf32, #tpu.memory_space<vmem>>, vector<8x3xf32>
    %cst_20 = arith.constant dense<0xFF800000> : vector<8xf32>
    %36 = vector.multi_reduction <maximumf>, %35, %cst_20 [1] : vector<8x3xf32> to vector<8xf32>
    %37 = vector.shape_cast %36 : vector<8xf32> to vector<8x1xf32>
    %38 = vector.broadcast %37 : vector<8x1xf32> to vector<8x3xf32>
    %39 = arith.subf %35, %38 : vector<8x3xf32>
    %40 = math.exp %39 : vector<8x3xf32>
    %cst_21 = arith.constant dense<0.000000e+00> : vector<8xf32>
    %41 = vector.multi_reduction <add>, %40, %cst_21 [1] : vector<8x3xf32> to vector<8xf32>
    %42 = vector.shape_cast %41 : vector<8xf32> to vector<8x1xf32>
    %43 = tpu.reciprocal %42 {approx = true} : vector<8x1xf32> -> vector<8x1xf32>
    %44 = vector.broadcast %43 : vector<8x1xf32> to vector<8x3xf32>
    %45 = arith.mulf %40, %44 : vector<8x3xf32>
    %cst_22 = arith.constant 1.000000e+00 : f32
    %46 = vector.broadcast %cst_22 : f32 to vector<8x3xf32>
    %47 = arith.subf %46, %45 : vector<8x3xf32>
    %cst_23 = arith.constant 5.000000e-01 : f32
    %48 = vector.broadcast %cst_23 : f32 to vector<8x3xf32>
    %49 = arith.mulf %47, %48 : vector<8x3xf32>
    %c0_24 = arith.constant 0 : index
    %c0_25 = arith.constant 0 : index
    %50 = vector.load %arg4[%c0_24, %c0_25] : memref<8x3xf32, #tpu.memory_space<vmem>>, vector<8x3xf32>
    %cst_26 = arith.constant dense<0xFF800000> : vector<8xf32>
    %51 = vector.multi_reduction <maximumf>, %50, %cst_26 [1] : vector<8x3xf32> to vector<8xf32>
    %52 = vector.shape_cast %51 : vector<8xf32> to vector<8x1xf32>
    %53 = vector.broadcast %52 : vector<8x1xf32> to vector<8x3xf32>
    %54 = arith.subf %50, %53 : vector<8x3xf32>
    %55 = math.exp %54 : vector<8x3xf32>
    %cst_27 = arith.constant dense<0.000000e+00> : vector<8xf32>
    %56 = vector.multi_reduction <add>, %55, %cst_27 [1] : vector<8x3xf32> to vector<8xf32>
    %57 = vector.shape_cast %56 : vector<8xf32> to vector<8x1xf32>
    %58 = tpu.reciprocal %57 {approx = true} : vector<8x1xf32> -> vector<8x1xf32>
    %59 = vector.broadcast %58 : vector<8x1xf32> to vector<8x3xf32>
    %60 = arith.mulf %55, %59 : vector<8x3xf32>
    %c0_28 = arith.constant 0 : index
    %c0_29 = arith.constant 0 : index
    %61 = vector.load %arg5[%c0_28, %c0_29] : memref<8x3xf32, #tpu.memory_space<vmem>>, vector<8x3xf32>
    %cst_30 = arith.constant dense<0xFF800000> : vector<8xf32>
    %62 = vector.multi_reduction <maximumf>, %61, %cst_30 [1] : vector<8x3xf32> to vector<8xf32>
    %63 = vector.shape_cast %62 : vector<8xf32> to vector<8x1xf32>
    %64 = vector.broadcast %63 : vector<8x1xf32> to vector<8x3xf32>
    %65 = arith.subf %61, %64 : vector<8x3xf32>
    %66 = math.exp %65 : vector<8x3xf32>
    %cst_31 = arith.constant dense<0.000000e+00> : vector<8xf32>
    %67 = vector.multi_reduction <add>, %66, %cst_31 [1] : vector<8x3xf32> to vector<8xf32>
    %68 = vector.shape_cast %67 : vector<8xf32> to vector<8x1xf32>
    %69 = tpu.reciprocal %68 {approx = true} : vector<8x1xf32> -> vector<8x1xf32>
    %70 = vector.broadcast %69 : vector<8x1xf32> to vector<8x3xf32>
    %71 = arith.mulf %66, %70 : vector<8x3xf32>
    %72 = arith.addf %24, %49 : vector<8x3xf32>
    %73 = arith.addf %72, %60 : vector<8x3xf32>
    %cst_32 = arith.constant 0.333333343 : f32
    %74 = vector.broadcast %cst_32 : f32 to vector<8x3xf32>
    %75 = arith.mulf %73, %74 : vector<8x3xf32>
    %c0_33 = arith.constant 0 : index
    %c0_34 = arith.constant 0 : index
    %76 = vector.load %arg10[%c0_33, %c0_34] : memref<8x3xf32, #tpu.memory_space<vmem>>, vector<8x3xf32>
    tpu.vector_store %arg10[%c0_33, %c0_34], %75 {strides = array<i32>} : memref<8x3xf32, #tpu.memory_space<vmem>>, vector<8x3xf32>,
    %77 = arith.addf %34, %49 : vector<8x3xf32>
    %78 = arith.addf %77, %71 : vector<8x3xf32>
    %cst_35 = arith.constant 0.333333343 : f32
    %79 = vector.broadcast %cst_35 : f32 to vector<8x3xf32>
    %80 = arith.mulf %78, %79 : vector<8x3xf32>
    %c0_36 = arith.constant 0 : index
    %c0_37 = arith.constant 0 : index
    %81 = vector.load %arg11[%c0_36, %c0_37] : memref<8x3xf32, #tpu.memory_space<vmem>>, vector<8x3xf32>
    tpu.vector_store %arg11[%c0_36, %c0_37], %80 {strides = array<i32>} : memref<8x3xf32, #tpu.memory_space<vmem>>, vector<8x3xf32>,
    return
  }
  func.func @transform_0(%arg0: i32) -> (i32, i32) {
    %c0_i32 = arith.constant 0 : i32
    %c0_i32_0 = arith.constant 0 : i32
    return %arg0, %c0_i32 : i32, i32
  }
  func.func @transform_1(%arg0: i32) -> (i32, i32) {
    %c0_i32 = arith.constant 0 : i32
    %c0_i32_0 = arith.constant 0 : i32
    %c0_i32_1 = arith.constant 0 : i32
    return %c0_i32, %c0_i32_0 : i32, i32
  }
  func.func @transform_2(%arg0: i32) -> (i32, i32) {
    %c0_i32 = arith.constant 0 : i32
    %c0_i32_0 = arith.constant 0 : i32
    return %arg0, %c0_i32 : i32, i32
  }
  func.func @transform_3(%arg0: i32) -> (i32, i32) {
    %c0_i32 = arith.constant 0 : i32
    %c0_i32_0 = arith.constant 0 : i32
    return %arg0, %c0_i32 : i32, i32
  }
  func.func @transform_4(%arg0: i32) -> (i32, i32) {
    %c0_i32 = arith.constant 0 : i32
    %c0_i32_0 = arith.constant 0 : i32
    return %arg0, %c0_i32 : i32, i32
  }
  func.func @transform_5(%arg0: i32) -> (i32, i32) {
    %c0_i32 = arith.constant 0 : i32
    %c0_i32_0 = arith.constant 0 : i32
    %c0_i32_1 = arith.constant 0 : i32
    return %c0_i32, %c0_i32_0 : i32, i32
  }
  func.func @transform_6(%arg0: i32) -> (i32, i32) {
    %c0_i32 = arith.constant 0 : i32
    %c0_i32_0 = arith.constant 0 : i32
    %c0_i32_1 = arith.constant 0 : i32
    return %c0_i32, %c0_i32_0 : i32, i32
  }
  func.func @transform_7(%arg0: i32) -> (i32, i32) {
    %c0_i32 = arith.constant 0 : i32
    %c0_i32_0 = arith.constant 0 : i32
    %c0_i32_1 = arith.constant 0 : i32
    return %c0_i32, %c0_i32_0 : i32, i32
  }
  func.func @transform_8(%arg0: i32) -> (i32, i32) {
    %c0_i32 = arith.constant 0 : i32
    %c0_i32_0 = arith.constant 0 : i32
    %c0_i32_1 = arith.constant 0 : i32
    return %c0_i32, %c0_i32_0 : i32, i32
  }
  func.func @transform_9(%arg0: i32) -> (i32, i32) {
    %c0_i32 = arith.constant 0 : i32
    %c0_i32_0 = arith.constant 0 : i32
    return %arg0, %c0_i32 : i32, i32
  }
  func.func @transform_10(%arg0: i32) -> (i32, i32) {
    %c0_i32 = arith.constant 0 : i32
    %c0_i32_0 = arith.constant 0 : i32
    return %arg0, %c0_i32 : i32, i32
  }
}

module attributes {stable_mosaic.version = 11 : i64} {
  func.func @kernel(%arg0: i32, %arg1: memref<8x48xf32, #tpu.memory_space<vmem>>, %arg2: memref<48x128xf32, #tpu.memory_space<vmem>>, %arg3: memref<8x3xf32, #tpu.memory_space<vmem>>, %arg4: memref<8x3xf32, #tpu.memory_space<vmem>>, %arg5: memref<8x3xf32, #tpu.memory_space<vmem>>, %arg6: memref<128x3xf32, #tpu.memory_space<vmem>>, %arg7: memref<1x3xf32, #tpu.memory_space<vmem>>, %arg8: memref<128x3xf32, #tpu.memory_space<vmem>>, %arg9: memref<1x3xf32, #tpu.memory_space<vmem>>, %arg10: memref<8x3xf32, #tpu.memory_space<vmem>>, %arg11: memref<8x3xf32, #tpu.memory_space<vmem>>) attributes {dimension_semantics = [#tpu.dimension_semantics<parallel>], iteration_bounds = array<i64: 1>, scalar_prefetch = 0 : i64, scratch_operands = 0 : i64, tpu.core_type = #tpu.core_type<tc>, window_params = [{transform_indices = @transform_0, window_bounds = array<i64: 8, 48>}, {pipeline_mode = #tpu.pipeline_mode<synchronous>, transform_indices = @transform_1, window_bounds = array<i64: 48, 128>}, {transform_indices = @transform_2, window_bounds = array<i64: 8, 3>}, {transform_indices = @transform_3, window_bounds = array<i64: 8, 3>}, {transform_indices = @transform_4, window_bounds = array<i64: 8, 3>}, {pipeline_mode = #tpu.pipeline_mode<synchronous>, transform_indices = @transform_5, window_bounds = array<i64: 128, 3>}, {pipeline_mode = #tpu.pipeline_mode<synchronous>, transform_indices = @transform_6, window_bounds = array<i64: 1, 3>}, {pipeline_mode = #tpu.pipeline_mode<synchronous>, transform_indices = @transform_7, window_bounds = array<i64: 128, 3>}, {pipeline_mode = #tpu.pipeline_mode<synchronous>, transform_indices = @transform_8, window_bounds = array<i64: 1, 3>}, {transform_indices = @transform_9, window_bounds = array<i64: 8, 3>}, {transform_indices = @transform_10, window_bounds = array<i64: 8, 3>}]} {
    %c0 = arith.constant 0 : index
    %c0_0 = arith.constant 0 : index
    %0 = vector.load %arg1[%c0, %c0_0] : memref<8x48xf32, #tpu.memory_space<vmem>>, vector<8x48xf32>
    %c0_1 = arith.constant 0 : index
    %c0_2 = arith.constant 0 : index
    %1 = vector.load %arg2[%c0_1, %c0_2] : memref<48x128xf32, #tpu.memory_space<vmem>>, vector<48x128xf32>
    %cst = arith.constant dense<0.000000e+00> : vector<8x128xf32>
    %2 = tpu.matmul %0, %1, %cst {dimension_numbers = #tpu.dot_dimension_numbers<[1], [0], [0], [1], [0, 0, 1, 1], [], []>} : vector<8x48xf32>, vector<48x128xf32>, vector<8x128xf32> -> vector<8x128xf32>
    %cst_3 = arith.constant 0.000000e+00 : f32
    %3 = vector.broadcast %cst_3 : f32 to vector<8x128xf32>
    %4 = arith.maximumf %2, %3 : vector<8x128xf32>
    %c0_4 = arith.constant 0 : index
    %c0_5 = arith.constant 0 : index
    %5 = vector.load %arg6[%c0_4, %c0_5] : memref<128x3xf32, #tpu.memory_space<vmem>>, vector<128x3xf32>
    %cst_6 = arith.constant dense<0.000000e+00> : vector<8x3xf32>
    %6 = tpu.matmul %4, %5, %cst_6 {dimension_numbers = #tpu.dot_dimension_numbers<[1], [0], [0], [1], [0, 0, 1, 1], [], []>} : vector<8x128xf32>, vector<128x3xf32>, vector<8x3xf32> -> vector<8x3xf32>
    %c0_7 = arith.constant 0 : index
    %c0_8 = arith.constant 0 : index
    %7 = vector.load %arg7[%c0_7, %c0_8] : memref<1x3xf32, #tpu.memory_space<vmem>>, vector<1x3xf32>
    %8 = vector.broadcast %7 : vector<1x3xf32> to vector<8x3xf32>
    %9 = arith.addf %6, %8 : vector<8x3xf32>
    %c0_9 = arith.constant 0 : index
    %c0_10 = arith.constant 0 : index
    %10 = vector.load %arg8[%c0_9, %c0_10] : memref<128x3xf32, #tpu.memory_space<vmem>>, vector<128x3xf32>
    %cst_11 = arith.constant dense<0.000000e+00> : vector<8x3xf32>
    %11 = tpu.matmul %4, %10, %cst_11 {dimension_numbers = #tpu.dot_dimension_numbers<[1], [0], [0], [1], [0, 0, 1, 1], [], []>} : vector<8x128xf32>, vector<128x3xf32>, vector<8x3xf32> -> vector<8x3xf32>
    %c0_12 = arith.constant 0 : index
    %c0_13 = arith.constant 0 : index
    %12 = vector.load %arg9[%c0_12, %c0_13] : memref<1x3xf32, #tpu.memory_space<vmem>>, vector<1x3xf32>
    %13 = vector.broadcast %12 : vector<1x3xf32> to vector<8x3xf32>
    %14 = arith.addf %11, %13 : vector<8x3xf32>
    %cst_14 = arith.constant dense<0xFF800000> : vector<8xf32>
    %15 = vector.multi_reduction <maximumf>, %9, %cst_14 [1] : vector<8x3xf32> to vector<8xf32>
    %16 = vector.shape_cast %15 : vector<8xf32> to vector<8x1xf32>
    %17 = vector.broadcast %16 : vector<8x1xf32> to vector<8x3xf32>
    %18 = arith.subf %9, %17 : vector<8x3xf32>
    %19 = math.exp %18 : vector<8x3xf32>
    %cst_15 = arith.constant dense<0.000000e+00> : vector<8xf32>
    %20 = vector.multi_reduction <add>, %19, %cst_15 [1] : vector<8x3xf32> to vector<8xf32>
    %21 = vector.shape_cast %20 : vector<8xf32> to vector<8x1xf32>
    %22 = tpu.reciprocal %21 {approx = true} : vector<8x1xf32> -> vector<8x1xf32>
    %23 = vector.broadcast %22 : vector<8x1xf32> to vector<8x3xf32>
    %24 = arith.mulf %19, %23 : vector<8x3xf32>
    %cst_16 = arith.constant dense<0xFF800000> : vector<8xf32>
    %25 = vector.multi_reduction <maximumf>, %14, %cst_16 [1] : vector<8x3xf32> to vector<8xf32>
    %26 = vector.shape_cast %25 : vector<8xf32> to vector<8x1xf32>
    %27 = vector.broadcast %26 : vector<8x1xf32> to vector<8x3xf32>
    %28 = arith.subf %14, %27 : vector<8x3xf32>
    %29 = math.exp %28 : vector<8x3xf32>
    %cst_17 = arith.constant dense<0.000000e+00> : vector<8xf32>
    %30 = vector.multi_reduction <add>, %29, %cst_17 [1] : vector<8x3xf32> to vector<8xf32>
    %31 = vector.shape_cast %30 : vector<8xf32> to vector<8x1xf32>
    %32 = tpu.reciprocal %31 {approx = true} : vector<8x1xf32> -> vector<8x1xf32>
    %33 = vector.broadcast %32 : vector<8x1xf32> to vector<8x3xf32>
    %34 = arith.mulf %29, %33 : vector<8x3xf32>
    %c0_18 = arith.constant 0 : index
    %c0_19 = arith.constant 0 : index
    %35 = vector.load %arg3[%c0_18, %c0_19] : memref<8x3xf32, #tpu.memory_space<vmem>>, vector<8x3xf32>
    %cst_20 = arith.constant dense<0xFF800000> : vector<8xf32>
    %36 = vector.multi_reduction <maximumf>, %35, %cst_20 [1] : vector<8x3xf32> to vector<8xf32>
    %37 = vector.shape_cast %36 : vector<8xf32> to vector<8x1xf32>
    %38 = vector.broadcast %37 : vector<8x1xf32> to vector<8x3xf32>
    %39 = arith.subf %35, %38 : vector<8x3xf32>
    %40 = math.exp %39 : vector<8x3xf32>
    %cst_21 = arith.constant dense<0.000000e+00> : vector<8xf32>
    %41 = vector.multi_reduction <add>, %40, %cst_21 [1] : vector<8x3xf32> to vector<8xf32>
    %42 = vector.shape_cast %41 : vector<8xf32> to vector<8x1xf32>
    %43 = tpu.reciprocal %42 {approx = true} : vector<8x1xf32> -> vector<8x1xf32>
    %44 = vector.broadcast %43 : vector<8x1xf32> to vector<8x3xf32>
    %45 = arith.mulf %40, %44 : vector<8x3xf32>
    %cst_22 = arith.constant 1.000000e+00 : f32
    %46 = vector.broadcast %cst_22 : f32 to vector<8x3xf32>
    %47 = arith.subf %46, %45 : vector<8x3xf32>
    %cst_23 = arith.constant 5.000000e-01 : f32
    %48 = vector.broadcast %cst_23 : f32 to vector<8x3xf32>
    %49 = arith.mulf %47, %48 : vector<8x3xf32>
    %c0_24 = arith.constant 0 : index
    %c0_25 = arith.constant 0 : index
    %50 = vector.load %arg4[%c0_24, %c0_25] : memref<8x3xf32, #tpu.memory_space<vmem>>, vector<8x3xf32>
    %cst_26 = arith.constant dense<0xFF800000> : vector<8xf32>
    %51 = vector.multi_reduction <maximumf>, %50, %cst_26 [1] : vector<8x3xf32> to vector<8xf32>
    %52 = vector.shape_cast %51 : vector<8xf32> to vector<8x1xf32>
    %53 = vector.broadcast %52 : vector<8x1xf32> to vector<8x3xf32>
    %54 = arith.subf %50, %53 : vector<8x3xf32>
    %55 = math.exp %54 : vector<8x3xf32>
    %cst_27 = arith.constant dense<0.000000e+00> : vector<8xf32>
    %56 = vector.multi_reduction <add>, %55, %cst_27 [1] : vector<8x3xf32> to vector<8xf32>
    %57 = vector.shape_cast %56 : vector<8xf32> to vector<8x1xf32>
    %58 = tpu.reciprocal %57 {approx = true} : vector<8x1xf32> -> vector<8x1xf32>
    %59 = vector.broadcast %58 : vector<8x1xf32> to vector<8x3xf32>
    %60 = arith.mulf %55, %59 : vector<8x3xf32>
    %c0_28 = arith.constant 0 : index
    %c0_29 = arith.constant 0 : index
    %61 = vector.load %arg5[%c0_28, %c0_29] : memref<8x3xf32, #tpu.memory_space<vmem>>, vector<8x3xf32>
    %cst_30 = arith.constant dense<0xFF800000> : vector<8xf32>
    %62 = vector.multi_reduction <maximumf>, %61, %cst_30 [1] : vector<8x3xf32> to vector<8xf32>
    %63 = vector.shape_cast %62 : vector<8xf32> to vector<8x1xf32>
    %64 = vector.broadcast %63 : vector<8x1xf32> to vector<8x3xf32>
    %65 = arith.subf %61, %64 : vector<8x3xf32>
    %66 = math.exp %65 : vector<8x3xf32>
    %cst_31 = arith.constant dense<0.000000e+00> : vector<8xf32>
    %67 = vector.multi_reduction <add>, %66, %cst_31 [1] : vector<8x3xf32> to vector<8xf32>
    %68 = vector.shape_cast %67 : vector<8xf32> to vector<8x1xf32>
    %69 = tpu.reciprocal %68 {approx = true} : vector<8x1xf32> -> vector<8x1xf32>
    %70 = vector.broadcast %69 : vector<8x1xf32> to vector<8x3xf32>
    %71 = arith.mulf %66, %70 : vector<8x3xf32>
    %72 = arith.addf %24, %49 : vector<8x3xf32>
    %73 = arith.addf %72, %60 : vector<8x3xf32>
    %cst_32 = arith.constant 0.333333343 : f32
    %74 = vector.broadcast %cst_32 : f32 to vector<8x3xf32>
    %75 = arith.mulf %73, %74 : vector<8x3xf32>
    %c0_33 = arith.constant 0 : index
    %c0_34 = arith.constant 0 : index
    %76 = vector.load %arg10[%c0_33, %c0_34] : memref<8x3xf32, #tpu.memory_space<vmem>>, vector<8x3xf32>
    tpu.vector_store %arg10[%c0_33, %c0_34], %75 {strides = array<i32>} : memref<8x3xf32, #tpu.memory_space<vmem>>, vector<8x3xf32>,
    %77 = arith.addf %34, %49 : vector<8x3xf32>
    %78 = arith.addf %77, %71 : vector<8x3xf32>
    %cst_35 = arith.constant 0.333333343 : f32
    %79 = vector.broadcast %cst_35 : f32 to vector<8x3xf32>
    %80 = arith.mulf %78, %79 : vector<8x3xf32>
    %c0_36 = arith.constant 0 : index
    %c0_37 = arith.constant 0 : index
    %81 = vector.load %arg11[%c0_36, %c0_37] : memref<8x3xf32, #tpu.memory_space<vmem>>, vector<8x3xf32>
    tpu.vector_store %arg11[%c0_36, %c0_37], %80 {strides = array<i32>} : memref<8x3xf32, #tpu.memory_space<vmem>>, vector<8x3xf32>,
    return
  }
  func.func @transform_0(%arg0: i32) -> (i32, i32) {
    %c0_i32 = arith.constant 0 : i32
    %c0_i32_0 = arith.constant 0 : i32
    return %arg0, %c0_i32 : i32, i32
  }
  func.func @transform_1(%arg0: i32) -> (i32, i32) {
    %c0_i32 = arith.constant 0 : i32
    %c0_i32_0 = arith.constant 0 : i32
    %c0_i32_1 = arith.constant 0 : i32
    return %c0_i32, %c0_i32_0 : i32, i32
  }
  func.func @transform_2(%arg0: i32) -> (i32, i32) {
    %c0_i32 = arith.constant 0 : i32
    %c0_i32_0 = arith.constant 0 : i32
    return %arg0, %c0_i32 : i32, i32
  }
  func.func @transform_3(%arg0: i32) -> (i32, i32) {
    %c0_i32 = arith.constant 0 : i32
    %c0_i32_0 = arith.constant 0 : i32
    return %arg0, %c0_i32 : i32, i32
  }
  func.func @transform_4(%arg0: i32) -> (i32, i32) {
    %c0_i32 = arith.constant 0 : i32
    %c0_i32_0 = arith.constant 0 : i32
    return %arg0, %c0_i32 : i32, i32
  }
  func.func @transform_5(%arg0: i32) -> (i32, i32) {
    %c0_i32 = arith.constant 0 : i32
    %c0_i32_0 = arith.constant 0 : i32
    %c0_i32_1 = arith.constant 0 : i32
    return %c0_i32, %c0_i32_0 : i32, i32
  }
  func.func @transform_6(%arg0: i32) -> (i32, i32) {
    %c0_i32 = arith.constant 0 : i32
    %c0_i32_0 = arith.constant 0 : i32
    %c0_i32_1 = arith.constant 0 : i32
    return %c0_i32, %c0_i32_0 : i32, i32
  }
  func.func @transform_7(%arg0: i32) -> (i32, i32) {
    %c0_i32 = arith.constant 0 : i32
    %c0_i32_0 = arith.constant 0 : i32
    %c0_i32_1 = arith.constant 0 : i32
    return %c0_i32, %c0_i32_0 : i32, i32
  }
  func.func @transform_8(%arg0: i32) -> (i32, i32) {
    %c0_i32 = arith.constant 0 : i32
    %c0_i32_0 = arith.constant 0 : i32
    %c0_i32_1 = arith.constant 0 : i32
    return %c0_i32, %c0_i32_0 : i32, i32
  }
  func.func @transform_9(%arg0: i32) -> (i32, i32) {
    %c0_i32 = arith.constant 0 : i32
    %c0_i32_0 = arith.constant 0 : i32
    return %arg0, %c0_i32 : i32, i32
  }
  func.func @transform_10(%arg0: i32) -> (i32, i32) {
    %c0_i32 = arith.constant 0 : i32
    %c0_i32_0 = arith.constant 0 : i32
    return %arg0, %c0_i32 : i32, i32
  }
}

</mosaic_0001>

<llo_original>
// kernel: tpu_custom_call.1
$region0: #{tpu_custom_call.1}
  #allocation0 [shape = 'u32[]', space=smem, size = 0x4, offset = 0x4, fixed_abs, tag = 'smem constant byte address 0x4 - core index']
  #allocation1 [shape = 'u32[72,128]{1,0:T(1,128)}', space=vmem, size = 0x9000, scoped, tag = 'internal scratch']
  %s0 = inlined_call_operand.vmem [shape: f32[8,48], index: 0, kind: input, shape index: {}]
  %s1 = inlined_call_operand.vmem [shape: f32[48,128], index: 1, kind: input, shape index: {}]
  %s2 = inlined_call_operand.vmem [shape: f32[8,3], index: 2, kind: input, shape index: {}]
  %s3 = inlined_call_operand.vmem [shape: f32[8,3], index: 3, kind: input, shape index: {}]
  %s4 = inlined_call_operand.vmem [shape: f32[8,3], index: 4, kind: input, shape index: {}]
  %s5 = inlined_call_operand.vmem [shape: f32[128,3], index: 5, kind: input, shape index: {}]
  %s6 = inlined_call_operand.vmem [shape: f32[1,3], index: 6, kind: input, shape index: {}]
  %s7 = inlined_call_operand.vmem [shape: f32[128,3], index: 7, kind: input, shape index: {}]
  %s8 = inlined_call_operand.vmem [shape: f32[1,3], index: 8, kind: input, shape index: {}]
  %s9 = inlined_call_operand.vmem [shape: f32[8,3], index: 9, kind: output, shape index: {0}]
  %s10 = inlined_call_operand.vmem [shape: f32[8,3], index: 10, kind: output, shape index: {1}]
  %11 = xla_tuple %s9, %s10
  %s12 = sld [smem:[#allocation0]]
  $region54: #{tpu_custom_call.1} parent=0
    _
  %s14 = ssub.s32 1, %s12
  %s15 = scalar_select 0, %s14, %s12
  // Predicated region
  $region2: #{tpu_custom_call.1} parent=0 // pred_check
    _
  $region3: #{tpu_custom_call.1} parent=0 // pred_check_branch
    %17 = sbr.rel (0) target = $region5
  $region4: #{tpu_custom_call.1} parent=0 // pred_region
    _
  $region5: #{tpu_custom_call.1} parent=0 // pred_fallthru
    _
  // Predicated region
  $region6: #{tpu_custom_call.1} parent=0 // pred_check
    _
  $region7: #{tpu_custom_call.1} parent=0 // pred_check_branch
    %19 = sbr.rel (0) target = $region9
  $region8: #{tpu_custom_call.1} parent=0 // pred_region
    _
  $region9: #{tpu_custom_call.1} parent=0 // pred_fallthru
    _
  // Predicated region
  $region10: #{tpu_custom_call.1} parent=0 // pred_check
    _
  $region11: #{tpu_custom_call.1} parent=0 // pred_check_branch
    %21 = sbr.rel (0) target = $region13
  $region12: #{tpu_custom_call.1} parent=0 // pred_region
    _
  $region13: #{tpu_custom_call.1} parent=0 // pred_fallthru
    _
  // Predicated region
  $region14: #{tpu_custom_call.1} parent=0 // pred_check
    _
  $region15: #{tpu_custom_call.1} parent=0 // pred_check_branch
    %23 = sbr.rel (0) target = $region17
  $region16: #{tpu_custom_call.1} parent=0 // pred_region
    _
  $region17: #{tpu_custom_call.1} parent=0 // pred_fallthru
    _
  // Predicated region
  $region18: #{tpu_custom_call.1} parent=0 // pred_check
    _
  $region19: #{tpu_custom_call.1} parent=0 // pred_check_branch
    %25 = sbr.rel (0) target = $region21
  $region20: #{tpu_custom_call.1} parent=0 // pred_region
    _
  $region21: #{tpu_custom_call.1} parent=0 // pred_fallthru
    _
  // Predicated region
  $region22: #{tpu_custom_call.1} parent=0 // pred_check
    _
  $region23: #{tpu_custom_call.1} parent=0 // pred_check_branch
    %27 = sbr.rel (0) target = $region25
  $region24: #{tpu_custom_call.1} parent=0 // pred_region
    _
  $region25: #{tpu_custom_call.1} parent=0 // pred_fallthru
    _
  // Predicated region
  $region26: #{tpu_custom_call.1} parent=0 // pred_check
    _
  $region27: #{tpu_custom_call.1} parent=0 // pred_check_branch
    %29 = sbr.rel (0) target = $region29
  $region28: #{tpu_custom_call.1} parent=0 // pred_region
    _
  $region29: #{tpu_custom_call.1} parent=0 // pred_fallthru
    _
  // Predicated region
  $region30: #{tpu_custom_call.1} parent=0 // pred_check
    _
  $region31: #{tpu_custom_call.1} parent=0 // pred_check_branch
    %31 = sbr.rel (0) target = $region33
  $region32: #{tpu_custom_call.1} parent=0 // pred_region
    _
  $region33: #{tpu_custom_call.1} parent=0 // pred_fallthru
    _
  // Predicated region
  $region34: #{tpu_custom_call.1} parent=0 // pred_check
    _
  $region35: #{tpu_custom_call.1} parent=0 // pred_check_branch
    %33 = sbr.rel (0) target = $region37
  $region36: #{tpu_custom_call.1} parent=0 // pred_region
    _
  $region37: #{tpu_custom_call.1} parent=0 // pred_fallthru
    _
  %v34 = vld [vmem:[%s0] sm:$0xff]
  %v35 = vld [vmem:[%s1] sm:$0xff]
  %v36 = vld [vmem:[%s1 + $0x8] sm:$0xff]
  %v37 = vld [vmem:[%s1 + $0x10] sm:$0xff]
  %v38 = vld [vmem:[%s1 + $0x18] sm:$0xff]
  %v39 = vld [vmem:[%s1 + $0x20] sm:$0xff]
  %v40 = vld [vmem:[%s1 + $0x28] sm:$0xff]
  %vm41 = vcmask 392192
  %v43 = vsel %vm41, %v34, 0
  %45 = vmatpush.msra.mxu0 0.0
  %46 = vmatpush.msra.mxu0 0.0
  %47 = vmatpush.msra.mxu0 0.0
  %48 = vmatpush.msra.mxu0 0.0
  %49 = vmatpush.msra.mxu0 0.0
  %50 = vmatpush.msra.mxu0 0.0
  %51 = vmatpush.msra.mxu0 0.0
  %52 = vmatpush.msra.mxu0 0.0
  %53 = vmatpush.msra.mxu0 0.0
  %54 = vmatpush.msra.mxu0 0.0
  %55 = vmatpush.msra.mxu0 %v40
  %56 = vmatpush.msra.mxu0 %v39
  %57 = vmatpush.msra.mxu0 %v38
  %58 = vmatpush.msra.mxu0 %v37
  %59 = vmatpush.msra.mxu0 %v36
  %60 = vmatpush.msra.mxu0 %v35
  %61 = vmatmul.f32.gmra.mxu0 %v43
  %v62 = vpop.f32.mrf.mxu0
  %v63 = vadd.f32 0.0, %v62
  %64 = vdwg.mxu0
  %v65 = vmax.f32 %v63, 0.0
  %v66 = vld [vmem:[%s5] sm:$0xff]
  %v67 = vld [vmem:[%s5 + $0x8] sm:$0xff]
  %v68 = vld [vmem:[%s5 + $0x10] sm:$0xff]
  %v69 = vld [vmem:[%s5 + $0x18] sm:$0xff]
  %v70 = vld [vmem:[%s5 + $0x20] sm:$0xff]
  %v71 = vld [vmem:[%s5 + $0x28] sm:$0xff]
  %v72 = vld [vmem:[%s5 + $0x30] sm:$0xff]
  %v73 = vld [vmem:[%s5 + $0x38] sm:$0xff]
  %v74 = vld [vmem:[%s5 + $0x40] sm:$0xff]
  %v75 = vld [vmem:[%s5 + $0x48] sm:$0xff]
  %v76 = vld [vmem:[%s5 + $0x50] sm:$0xff]
  %v77 = vld [vmem:[%s5 + $0x58] sm:$0xff]
  %v78 = vld [vmem:[%s5 + $0x60] sm:$0xff]
  %v79 = vld [vmem:[%s5 + $0x68] sm:$0xff]
  %v80 = vld [vmem:[%s5 + $0x70] sm:$0xff]
  %v81 = vld [vmem:[%s5 + $0x78] sm:$0xff]
  %v82 = vld [vmem:[%s6] sm:$0x1]
  %v84 = vperm.slane %v82, 0
  %86 = vmatpush.msra.mxu0 %v81
  %87 = vmatpush.msra.mxu0 %v80
  %88 = vmatpush.msra.mxu0 %v79
  %89 = vmatpush.msra.mxu0 %v78
  %90 = vmatpush.msra.mxu0 %v77
  %91 = vmatpush.msra.mxu0 %v76
  %92 = vmatpush.msra.mxu0 %v75
  %93 = vmatpush.msra.mxu0 %v74
  %94 = vmatpush.msra.mxu0 %v73
  %95 = vmatpush.msra.mxu0 %v72
  %96 = vmatpush.msra.mxu0 %v71
  %97 = vmatpush.msra.mxu0 %v70
  %98 = vmatpush.msra.mxu0 %v69
  %99 = vmatpush.msra.mxu0 %v68
  %100 = vmatpush.msra.mxu0 %v67
  %101 = vmatpush.msra.mxu0 %v66
  %102 = vmatmul.f32.gmra.mxu0 %v65
  %v103 = vpop.f32.mrf.mxu0
  %v104 = vadd.f32 %v84, %v103
  %105 = vdwg.mxu0
  %v106 = vld [vmem:[%s7] sm:$0xff]
  %v107 = vld [vmem:[%s7 + $0x8] sm:$0xff]
  %v108 = vld [vmem:[%s7 + $0x10] sm:$0xff]
  %v109 = vld [vmem:[%s7 + $0x18] sm:$0xff]
  %v110 = vld [vmem:[%s7 + $0x20] sm:$0xff]
  %v111 = vld [vmem:[%s7 + $0x28] sm:$0xff]
  %v112 = vld [vmem:[%s7 + $0x30] sm:$0xff]
  %v113 = vld [vmem:[%s7 + $0x38] sm:$0xff]
  %v114 = vld [vmem:[%s7 + $0x40] sm:$0xff]
  %v115 = vld [vmem:[%s7 + $0x48] sm:$0xff]
  %v116 = vld [vmem:[%s7 + $0x50] sm:$0xff]
  %v117 = vld [vmem:[%s7 + $0x58] sm:$0xff]
  %v118 = vld [vmem:[%s7 + $0x60] sm:$0xff]
  %v119 = vld [vmem:[%s7 + $0x68] sm:$0xff]
  %v120 = vld [vmem:[%s7 + $0x70] sm:$0xff]
  %v121 = vld [vmem:[%s7 + $0x78] sm:$0xff]
  %v122 = vld [vmem:[%s8] sm:$0x1]
  %v124 = vperm.slane %v122, 0
  %126 = vmatpush.msra.mxu0 %v121
  %127 = vmatpush.msra.mxu0 %v120
  %128 = vmatpush.msra.mxu0 %v119
  %129 = vmatpush.msra.mxu0 %v118
  %130 = vmatpush.msra.mxu0 %v117
  %131 = vmatpush.msra.mxu0 %v116
  %132 = vmatpush.msra.mxu0 %v115
  %133 = vmatpush.msra.mxu0 %v114
  %134 = vmatpush.msra.mxu0 %v113
  %135 = vmatpush.msra.mxu0 %v112
  %136 = vmatpush.msra.mxu0 %v111
  %137 = vmatpush.msra.mxu0 %v110
  %138 = vmatpush.msra.mxu0 %v109
  %139 = vmatpush.msra.mxu0 %v108
  %140 = vmatpush.msra.mxu0 %v107
  %141 = vmatpush.msra.mxu0 %v106
  %142 = vmatmul.f32.gmra.mxu0 %v65
  %v143 = vpop.f32.mrf.mxu0
  %v144 = vadd.f32 %v124, %v143
  %145 = vdwg.mxu0
  %vm146 = vcmask 23552
  %v147 = vsel %vm146, %v104, -inf
  %148 = vmax.xlane.f32.xlu0 %v147
  %v149 = vpop.xlane.xlu0 %148
  %v150 = vsub.f32 %v104, %v149
  %v151 = vmul.f32 %v150, 1.442695
  %v152 = vpow.pop %v151
  %v153 = vsel %vm146, %v152, 0.0
  %154 = vadd.xlane.f32.xlu0 %v153
  %v155 = vpop.xlane.xlu0 %154
  %v156 = vrcp.pop %v155
  %v157 = vmul.f32 %v152, %v156
  %v158 = vsel %vm146, %v144, -inf
  %159 = vmax.xlane.f32.xlu0 %v158
  %v160 = vpop.xlane.xlu0 %159
  %v161 = vsub.f32 %v144, %v160
  %v162 = vmul.f32 %v161, 1.442695
  %v163 = vpow.pop %v162
  %v164 = vsel %vm146, %v163, 0.0
  %165 = vadd.xlane.f32.xlu0 %v164
  %v166 = vpop.xlane.xlu0 %165
  %v167 = vrcp.pop %v166
  %v168 = vmul.f32 %v163, %v167
  %v169 = vld [vmem:[%s2] sm:$0xff]
  %v170 = vsel %vm146, %v169, -inf
  %171 = vmax.xlane.f32.xlu0 %v170
  %v172 = vpop.xlane.xlu0 %171
  %v173 = vsub.f32 %v169, %v172
  %v174 = vmul.f32 %v173, 1.442695
  %v175 = vpow.pop %v174
  %v176 = vsel %vm146, %v175, 0.0
  %177 = vadd.xlane.f32.xlu0 %v176
  %v178 = vpop.xlane.xlu0 %177
  %v179 = vrcp.pop %v178
  %v180 = vmul.f32 %v175, %v179
  %v181 = vsub.f32 1.0, %v180
  %v182 = vmul.f32 %v181, 0.5
  %v183 = vld [vmem:[%s3] sm:$0xff]
  %v184 = vsel %vm146, %v183, -inf
  %185 = vmax.xlane.f32.xlu0 %v184
  %v186 = vpop.xlane.xlu0 %185
  %v187 = vsub.f32 %v183, %v186
  %v188 = vmul.f32 %v187, 1.442695
  %v189 = vpow.pop %v188
  %v190 = vsel %vm146, %v189, 0.0
  %191 = vadd.xlane.f32.xlu0 %v190
  %v192 = vpop.xlane.xlu0 %191
  %v193 = vrcp.pop %v192
  %v194 = vmul.f32 %v189, %v193
  %v195 = vld [vmem:[%s4] sm:$0xff]
  %v196 = vsel %vm146, %v195, -inf
  %197 = vmax.xlane.f32.xlu0 %v196
  %v198 = vpop.xlane.xlu0 %197
  %v199 = vsub.f32 %v195, %v198
  %v200 = vmul.f32 %v199, 1.442695
  %v201 = vpow.pop %v200
  %v202 = vsel %vm146, %v201, 0.0
  %203 = vadd.xlane.f32.xlu0 %v202
  %v204 = vpop.xlane.xlu0 %203
  %v205 = vrcp.pop %v204
  %v206 = vmul.f32 %v201, %v205
  %v207 = vadd.f32 %v157, %v182
  %v208 = vadd.f32 %v207, %v194
  %v209 = vmul.f32 %v208, 0.33333334
  %210 = vst.msk [vmem:[%s9] sm:$0xff] %vm146, %v209
  %v211 = vadd.f32 %v168, %v182
  %v212 = vadd.f32 %v211, %v206
  %v213 = vmul.f32 %v212, 0.33333334
  %214 = vst.msk [vmem:[%s10] sm:$0xff] %vm146, %v213
  // Predicated region
  $region38: #{tpu_custom_call.1} parent=0 // pred_check
    _
  $region39: #{tpu_custom_call.1} parent=0 // pred_check_branch
    %216 = sbr.rel (0) target = $region41
  $region40: #{tpu_custom_call.1} parent=0 // pred_region
    _
  $region41: #{tpu_custom_call.1} parent=0 // pred_fallthru
    _
  // Predicated region
  $region42: #{tpu_custom_call.1} parent=0 // pred_check
    _
  $region43: #{tpu_custom_call.1} parent=0 // pred_check_branch
    %218 = sbr.rel (0) target = $region45
  $region44: #{tpu_custom_call.1} parent=0 // pred_region
    _
  $region45: #{tpu_custom_call.1} parent=0 // pred_fallthru
    _
  // Predicated region
  $region46: #{tpu_custom_call.1} parent=0 // pred_check
    _
  $region47: #{tpu_custom_call.1} parent=0 // pred_check_branch
    %220 = sbr.rel (0) target = $region49
  $region48: #{tpu_custom_call.1} parent=0 // pred_region
    _
  $region49: #{tpu_custom_call.1} parent=0 // pred_fallthru
    _
  // Predicated region
  $region50: #{tpu_custom_call.1} parent=0 // pred_check
    _
  $region51: #{tpu_custom_call.1} parent=0 // pred_check_branch
    %222 = sbr.rel (0) target = $region53
  $region52: #{tpu_custom_call.1} parent=0 // pred_region
    _
  $region53: #{tpu_custom_call.1} parent=0 // pred_fallthru
    _

// kernel: tpu_custom_call.1
$region0: #{tpu_custom_call.1}
  #allocation0 [shape = 'u32[]', space=smem, size = 0x4, offset = 0x4, fixed_abs, tag = 'smem constant byte address 0x4 - core index']
  #allocation1 [shape = 'u32[72,128]{1,0:T(1,128)}', space=vmem, size = 0x9000, scoped, tag = 'internal scratch']
  %s0 = inlined_call_operand.vmem [shape: f32[8,48], index: 0, kind: input, shape index: {}]
  %s1 = inlined_call_operand.vmem [shape: f32[48,128], index: 1, kind: input, shape index: {}]
  %s2 = inlined_call_operand.vmem [shape: f32[8,3], index: 2, kind: input, shape index: {}]
  %s3 = inlined_call_operand.vmem [shape: f32[8,3], index: 3, kind: input, shape index: {}]
  %s4 = inlined_call_operand.vmem [shape: f32[8,3], index: 4, kind: input, shape index: {}]
  %s5 = inlined_call_operand.vmem [shape: f32[128,3], index: 5, kind: input, shape index: {}]
  %s6 = inlined_call_operand.vmem [shape: f32[1,3], index: 6, kind: input, shape index: {}]
  %s7 = inlined_call_operand.vmem [shape: f32[128,3], index: 7, kind: input, shape index: {}]
  %s8 = inlined_call_operand.vmem [shape: f32[1,3], index: 8, kind: input, shape index: {}]
  %s9 = inlined_call_operand.vmem [shape: f32[8,3], index: 9, kind: output, shape index: {0}]
  %s10 = inlined_call_operand.vmem [shape: f32[8,3], index: 10, kind: output, shape index: {1}]
  %11 = xla_tuple %s9, %s10
  %s12 = sld [smem:[#allocation0]]
  $region54: #{tpu_custom_call.1} parent=0
    _
  %s14 = ssub.s32 1, %s12
  %s15 = scalar_select 0, %s14, %s12
  // Predicated region
  $region2: #{tpu_custom_call.1} parent=0 // pred_check
    _
  $region3: #{tpu_custom_call.1} parent=0 // pred_check_branch
    %17 = sbr.rel (0) target = $region5
  $region4: #{tpu_custom_call.1} parent=0 // pred_region
    _
  $region5: #{tpu_custom_call.1} parent=0 // pred_fallthru
    _
  // Predicated region
  $region6: #{tpu_custom_call.1} parent=0 // pred_check
    _
  $region7: #{tpu_custom_call.1} parent=0 // pred_check_branch
    %19 = sbr.rel (0) target = $region9
  $region8: #{tpu_custom_call.1} parent=0 // pred_region
    _
  $region9: #{tpu_custom_call.1} parent=0 // pred_fallthru
    _
  // Predicated region
  $region10: #{tpu_custom_call.1} parent=0 // pred_check
    _
  $region11: #{tpu_custom_call.1} parent=0 // pred_check_branch
    %21 = sbr.rel (0) target = $region13
  $region12: #{tpu_custom_call.1} parent=0 // pred_region
    _
  $region13: #{tpu_custom_call.1} parent=0 // pred_fallthru
    _
  // Predicated region
  $region14: #{tpu_custom_call.1} parent=0 // pred_check
    _
  $region15: #{tpu_custom_call.1} parent=0 // pred_check_branch
    %23 = sbr.rel (0) target = $region17
  $region16: #{tpu_custom_call.1} parent=0 // pred_region
    _
  $region17: #{tpu_custom_call.1} parent=0 // pred_fallthru
    _
  // Predicated region
  $region18: #{tpu_custom_call.1} parent=0 // pred_check
    _
  $region19: #{tpu_custom_call.1} parent=0 // pred_check_branch
    %25 = sbr.rel (0) target = $region21
  $region20: #{tpu_custom_call.1} parent=0 // pred_region
    _
  $region21: #{tpu_custom_call.1} parent=0 // pred_fallthru
    _
  // Predicated region
  $region22: #{tpu_custom_call.1} parent=0 // pred_check
    _
  $region23: #{tpu_custom_call.1} parent=0 // pred_check_branch
    %27 = sbr.rel (0) target = $region25
  $region24: #{tpu_custom_call.1} parent=0 // pred_region
    _
  $region25: #{tpu_custom_call.1} parent=0 // pred_fallthru
    _
  // Predicated region
  $region26: #{tpu_custom_call.1} parent=0 // pred_check
    _
  $region27: #{tpu_custom_call.1} parent=0 // pred_check_branch
    %29 = sbr.rel (0) target = $region29
  $region28: #{tpu_custom_call.1} parent=0 // pred_region
    _
  $region29: #{tpu_custom_call.1} parent=0 // pred_fallthru
    _
  // Predicated region
  $region30: #{tpu_custom_call.1} parent=0 // pred_check
    _
  $region31: #{tpu_custom_call.1} parent=0 // pred_check_branch
    %31 = sbr.rel (0) target = $region33
  $region32: #{tpu_custom_call.1} parent=0 // pred_region
    _
  $region33: #{tpu_custom_call.1} parent=0 // pred_fallthru
    _
  // Predicated region
  $region34: #{tpu_custom_call.1} parent=0 // pred_check
    _
  $region35: #{tpu_custom_call.1} parent=0 // pred_check_branch
    %33 = sbr.rel (0) target = $region37
  $region36: #{tpu_custom_call.1} parent=0 // pred_region
    _
  $region37: #{tpu_custom_call.1} parent=0 // pred_fallthru
    _
  %v34 = vld [vmem:[%s0] sm:$0xff]
  %v35 = vld [vmem:[%s1] sm:$0xff]
  %v36 = vld [vmem:[%s1 + $0x8] sm:$0xff]
  %v37 = vld [vmem:[%s1 + $0x10] sm:$0xff]
  %v38 = vld [vmem:[%s1 + $0x18] sm:$0xff]
  %v39 = vld [vmem:[%s1 + $0x20] sm:$0xff]
  %v40 = vld [vmem:[%s1 + $0x28] sm:$0xff]
  %vm41 = vcmask 392192
  %v43 = vsel %vm41, %v34, 0
  %45 = vmatpush.msra.mxu0 0.0
  %46 = vmatpush.msra.mxu0 0.0
  %47 = vmatpush.msra.mxu0 0.0
  %48 = vmatpush.msra.mxu0 0.0
  %49 = vmatpush.msra.mxu0 0.0
  %50 = vmatpush.msra.mxu0 0.0
  %51 = vmatpush.msra.mxu0 0.0
  %52 = vmatpush.msra.mxu0 0.0
  %53 = vmatpush.msra.mxu0 0.0
  %54 = vmatpush.msra.mxu0 0.0
  %55 = vmatpush.msra.mxu0 %v40
  %56 = vmatpush.msra.mxu0 %v39
  %57 = vmatpush.msra.mxu0 %v38
  %58 = vmatpush.msra.mxu0 %v37
  %59 = vmatpush.msra.mxu0 %v36
  %60 = vmatpush.msra.mxu0 %v35
  %61 = vmatmul.f32.gmra.mxu0 %v43
  %v62 = vpop.f32.mrf.mxu0
  %v63 = vadd.f32 0.0, %v62
  %64 = vdwg.mxu0
  %v65 = vmax.f32 %v63, 0.0
  %v66 = vld [vmem:[%s5] sm:$0xff]
  %v67 = vld [vmem:[%s5 + $0x8] sm:$0xff]
  %v68 = vld [vmem:[%s5 + $0x10] sm:$0xff]
  %v69 = vld [vmem:[%s5 + $0x18] sm:$0xff]
  %v70 = vld [vmem:[%s5 + $0x20] sm:$0xff]
  %v71 = vld [vmem:[%s5 + $0x28] sm:$0xff]
  %v72 = vld [vmem:[%s5 + $0x30] sm:$0xff]
  %v73 = vld [vmem:[%s5 + $0x38] sm:$0xff]
  %v74 = vld [vmem:[%s5 + $0x40] sm:$0xff]
  %v75 = vld [vmem:[%s5 + $0x48] sm:$0xff]
  %v76 = vld [vmem:[%s5 + $0x50] sm:$0xff]
  %v77 = vld [vmem:[%s5 + $0x58] sm:$0xff]
  %v78 = vld [vmem:[%s5 + $0x60] sm:$0xff]
  %v79 = vld [vmem:[%s5 + $0x68] sm:$0xff]
  %v80 = vld [vmem:[%s5 + $0x70] sm:$0xff]
  %v81 = vld [vmem:[%s5 + $0x78] sm:$0xff]
  %v82 = vld [vmem:[%s6] sm:$0x1]
  %v84 = vperm.slane %v82, 0
  %86 = vmatpush.msra.mxu0 %v81
  %87 = vmatpush.msra.mxu0 %v80
  %88 = vmatpush.msra.mxu0 %v79
  %89 = vmatpush.msra.mxu0 %v78
  %90 = vmatpush.msra.mxu0 %v77
  %91 = vmatpush.msra.mxu0 %v76
  %92 = vmatpush.msra.mxu0 %v75
  %93 = vmatpush.msra.mxu0 %v74
  %94 = vmatpush.msra.mxu0 %v73
  %95 = vmatpush.msra.mxu0 %v72
  %96 = vmatpush.msra.mxu0 %v71
  %97 = vmatpush.msra.mxu0 %v70
  %98 = vmatpush.msra.mxu0 %v69
  %99 = vmatpush.msra.mxu0 %v68
  %100 = vmatpush.msra.mxu0 %v67
  %101 = vmatpush.msra.mxu0 %v66
  %102 = vmatmul.f32.gmra.mxu0 %v65
  %v103 = vpop.f32.mrf.mxu0
  %v104 = vadd.f32 %v84, %v103
  %105 = vdwg.mxu0
  %v106 = vld [vmem:[%s7] sm:$0xff]
  %v107 = vld [vmem:[%s7 + $0x8] sm:$0xff]
  %v108 = vld [vmem:[%s7 + $0x10] sm:$0xff]
  %v109 = vld [vmem:[%s7 + $0x18] sm:$0xff]
  %v110 = vld [vmem:[%s7 + $0x20] sm:$0xff]
  %v111 = vld [vmem:[%s7 + $0x28] sm:$0xff]
  %v112 = vld [vmem:[%s7 + $0x30] sm:$0xff]
  %v113 = vld [vmem:[%s7 + $0x38] sm:$0xff]
  %v114 = vld [vmem:[%s7 + $0x40] sm:$0xff]
  %v115 = vld [vmem:[%s7 + $0x48] sm:$0xff]
  %v116 = vld [vmem:[%s7 + $0x50] sm:$0xff]
  %v117 = vld [vmem:[%s7 + $0x58] sm:$0xff]
  %v118 = vld [vmem:[%s7 + $0x60] sm:$0xff]
  %v119 = vld [vmem:[%s7 + $0x68] sm:$0xff]
  %v120 = vld [vmem:[%s7 + $0x70] sm:$0xff]
  %v121 = vld [vmem:[%s7 + $0x78] sm:$0xff]
  %v122 = vld [vmem:[%s8] sm:$0x1]
  %v124 = vperm.slane %v122, 0
  %126 = vmatpush.msra.mxu0 %v121
  %127 = vmatpush.msra.mxu0 %v120
  %128 = vmatpush.msra.mxu0 %v119
  %129 = vmatpush.msra.mxu0 %v118
  %130 = vmatpush.msra.mxu0 %v117
  %131 = vmatpush.msra.mxu0 %v116
  %132 = vmatpush.msra.mxu0 %v115
  %133 = vmatpush.msra.mxu0 %v114
  %134 = vmatpush.msra.mxu0 %v113
  %135 = vmatpush.msra.mxu0 %v112
  %136 = vmatpush.msra.mxu0 %v111
  %137 = vmatpush.msra.mxu0 %v110
  %138 = vmatpush.msra.mxu0 %v109
  %139 = vmatpush.msra.mxu0 %v108
  %140 = vmatpush.msra.mxu0 %v107
  %141 = vmatpush.msra.mxu0 %v106
  %142 = vmatmul.f32.gmra.mxu0 %v65
  %v143 = vpop.f32.mrf.mxu0
  %v144 = vadd.f32 %v124, %v143
  %145 = vdwg.mxu0
  %vm146 = vcmask 23552
  %v147 = vsel %vm146, %v104, -inf
  %148 = vmax.xlane.f32.xlu0 %v147
  %v149 = vpop.xlane.xlu0 %148
  %v150 = vsub.f32 %v104, %v149
  %v151 = vmul.f32 %v150, 1.442695
  %v152 = vpow.pop %v151
  %v153 = vsel %vm146, %v152, 0.0
  %154 = vadd.xlane.f32.xlu0 %v153
  %v155 = vpop.xlane.xlu0 %154
  %v156 = vrcp.pop %v155
  %v157 = vmul.f32 %v152, %v156
  %v158 = vsel %vm146, %v144, -inf
  %159 = vmax.xlane.f32.xlu0 %v158
  %v160 = vpop.xlane.xlu0 %159
  %v161 = vsub.f32 %v144, %v160
  %v162 = vmul.f32 %v161, 1.442695
  %v163 = vpow.pop %v162
  %v164 = vsel %vm146, %v163, 0.0
  %165 = vadd.xlane.f32.xlu0 %v164
  %v166 = vpop.xlane.xlu0 %165
  %v167 = vrcp.pop %v166
  %v168 = vmul.f32 %v163, %v167
  %v169 = vld [vmem:[%s2] sm:$0xff]
  %v170 = vsel %vm146, %v169, -inf
  %171 = vmax.xlane.f32.xlu0 %v170
  %v172 = vpop.xlane.xlu0 %171
  %v173 = vsub.f32 %v169, %v172
  %v174 = vmul.f32 %v173, 1.442695
  %v175 = vpow.pop %v174
  %v176 = vsel %vm146, %v175, 0.0
  %177 = vadd.xlane.f32.xlu0 %v176
  %v178 = vpop.xlane.xlu0 %177
  %v179 = vrcp.pop %v178
  %v180 = vmul.f32 %v175, %v179
  %v181 = vsub.f32 1.0, %v180
  %v182 = vmul.f32 %v181, 0.5
  %v183 = vld [vmem:[%s3] sm:$0xff]
  %v184 = vsel %vm146, %v183, -inf
  %185 = vmax.xlane.f32.xlu0 %v184
  %v186 = vpop.xlane.xlu0 %185
  %v187 = vsub.f32 %v183, %v186
  %v188 = vmul.f32 %v187, 1.442695
  %v189 = vpow.pop %v188
  %v190 = vsel %vm146, %v189, 0.0
  %191 = vadd.xlane.f32.xlu0 %v190
  %v192 = vpop.xlane.xlu0 %191
  %v193 = vrcp.pop %v192
  %v194 = vmul.f32 %v189, %v193
  %v195 = vld [vmem:[%s4] sm:$0xff]
  %v196 = vsel %vm146, %v195, -inf
  %197 = vmax.xlane.f32.xlu0 %v196
  %v198 = vpop.xlane.xlu0 %197
  %v199 = vsub.f32 %v195, %v198
  %v200 = vmul.f32 %v199, 1.442695
  %v201 = vpow.pop %v200
  %v202 = vsel %vm146, %v201, 0.0
  %203 = vadd.xlane.f32.xlu0 %v202
  %v204 = vpop.xlane.xlu0 %203
  %v205 = vrcp.pop %v204
  %v206 = vmul.f32 %v201, %v205
  %v207 = vadd.f32 %v157, %v182
  %v208 = vadd.f32 %v207, %v194
  %v209 = vmul.f32 %v208, 0.33333334
  %210 = vst.msk [vmem:[%s9] sm:$0xff] %vm146, %v209
  %v211 = vadd.f32 %v168, %v182
  %v212 = vadd.f32 %v211, %v206
  %v213 = vmul.f32 %v212, 0.33333334
  %214 = vst.msk [vmem:[%s10] sm:$0xff] %vm146, %v213
  // Predicated region
  $region38: #{tpu_custom_call.1} parent=0 // pred_check
    _
  $region39: #{tpu_custom_call.1} parent=0 // pred_check_branch
    %216 = sbr.rel (0) target = $region41
  $region40: #{tpu_custom_call.1} parent=0 // pred_region
    _
  $region41: #{tpu_custom_call.1} parent=0 // pred_fallthru
    _
  // Predicated region
  $region42: #{tpu_custom_call.1} parent=0 // pred_check
    _
  $region43: #{tpu_custom_call.1} parent=0 // pred_check_branch
    %218 = sbr.rel (0) target = $region45
  $region44: #{tpu_custom_call.1} parent=0 // pred_region
    _
  $region45: #{tpu_custom_call.1} parent=0 // pred_fallthru
    _
  // Predicated region
  $region46: #{tpu_custom_call.1} parent=0 // pred_check
    _
  $region47: #{tpu_custom_call.1} parent=0 // pred_check_branch
    %220 = sbr.rel (0) target = $region49
  $region48: #{tpu_custom_call.1} parent=0 // pred_region
    _
  $region49: #{tpu_custom_call.1} parent=0 // pred_fallthru
    _
  // Predicated region
  $region50: #{tpu_custom_call.1} parent=0 // pred_check
    _
  $region51: #{tpu_custom_call.1} parent=0 // pred_check_branch
    %222 = sbr.rel (0) target = $region53
  $region52: #{tpu_custom_call.1} parent=0 // pred_region
    _
  $region53: #{tpu_custom_call.1} parent=0 // pred_fallthru
    _

</llo_original>
